<compile_context>
chip_gen: v7x
topology: tpu7x:2x2x1
jax: 0.10.0
libtpu: 0.0.40
codegen_flags: <defaults>
</compile_context>

<pallas_src>
import functools

import jax
import jax.numpy as jnp
import numpy as np
from jax import lax
from jax.experimental import pallas as pl
from jax.experimental.pallas import tpu as pltpu


def entity_emb_kernel(ent_ids_ref, pos_ids_ref, fused_ref, pos_table_ref,
                      tok_ref, gamma_ref, beta_ref, out_ref, *, eps):
    tn = ent_ids_ref.shape[0]
    v_ent = fused_ref.shape[0]
    v_pos = pos_table_ref.shape[0]
    p_len = pos_ids_ref.shape[1]

    f32 = jnp.float32
    bf16 = jnp.bfloat16

    # ---- entity embedding gather: one-hot (exact in bf16) x fused bf16 table on the MXU,
    #      f32 accumulation.  The dense projection is pre-folded into the table.
    ent_iota = lax.broadcasted_iota(jnp.int32, (tn, v_ent), 1)
    ent_onehot = (ent_ids_ref[...] == ent_iota).astype(bf16)                 # (TN, Vent)
    ent_h = jnp.dot(ent_onehot, fused_ref[...], preferred_element_type=f32)  # (TN, H)

    # ---- position embeddings: masked mean over the mention span --------------------------
    # Accumulate a (TN, Vpos) count matrix: [t, v] = #{p : pos_ids[t, p] == v}.  A -1 padded
    # slot can never equal the non-negative iota, so no clamp / mask multiply is needed; the
    # mask only feeds the denominator.  One native-MXU matmul then does gather + masked-sum.
    pos_iota = lax.broadcasted_iota(jnp.int32, (tn, v_pos), 1)
    gather_w = jnp.zeros((tn, v_pos), f32)
    denom = jnp.zeros((tn, 1), f32)
    for p in range(p_len):                        # static unroll; P (mention span) is small
        ids_p = pos_ids_ref[:, p:p + 1]                                      # (TN, 1) int32
        gather_w = gather_w + (ids_p == pos_iota).astype(f32)
        denom = denom + (ids_p != -1).astype(f32)
    pos_sum = jnp.dot(gather_w.astype(bf16), pos_table_ref[...],             # counts exact in bf16
                      preferred_element_type=f32)                            # (TN, H)
    pos_h = pos_sum * pl.reciprocal(jnp.maximum(denom, 1e-7), approx=False)

    # ---- token_type_ids are all zeros -> row 0 of the token-type table -------------------
    emb = ent_h + pos_h + tok_ref[...]                                       # (TN, H) f32

    # ---- LayerNorm over hidden ------------------------------------------------------------
    mean = jnp.mean(emb, axis=-1, keepdims=True)
    cent = emb - mean
    var = jnp.mean(cent * cent, axis=-1, keepdims=True)
    y = (cent * lax.rsqrt(var + eps)) * gamma_ref[...] + beta_ref[...]
    out_ref[...] = y.astype(out_ref.dtype)
    # dropout: eval mode -> identity (no-op)


def _round_up(x, m):
    return (x + m - 1) // m * m


def _vmem_budget_bytes():
    """Generation-aware VMEM budget with headroom below physical capacity."""
    try:
        cap = int(pltpu.get_tpu_info().vmem_capacity_bytes)
    except Exception:
        cap = 64 << 20          # conservative default: v7x physical per-core VMEM
    return min(cap * 3 // 4, 96 << 20)


def _pick_tiling(n, p_len, v_ent, v_pos, h, out_bytes, budget):
    """Return (tile_n, n_pad, vmem_limit_bytes).

    Balanced row tiles sized from the VMEM budget; >=2 (and even) grid steps so both v7x
    TensorCores get work under dimension_semantics=('parallel',); padding waste <8 rows/tile.
    """
    # Resident operands (default pipelining double-buffers even constant-index blocks).
    resident = 2 * (v_ent * h * 2 + v_pos * h * 2 + 3 * h * 4)
    # Streamed ids + output (double-buffered) plus in-kernel f32 temporaries
    # (iotas, one-hot / count matrices, accumulators), with a fudge factor.
    per_row = 2 * (1 + p_len) * 4 + 2 * h * out_bytes
    per_row += 4 * (2 * v_ent + 3 * v_pos + 6 * h)
    avail = max(budget - resident, 8 * per_row)
    tile_cap = max(8, min(1024, avail // per_row) // 8 * 8)
    num_tiles = max(2, -(-n // tile_cap))          # >= 2 grid steps (v7x megacore)
    if num_tiles % 2:                              # even step count when possible
        num_tiles += 1
    tile_n = _round_up(-(-n // num_tiles), 8)
    n_pad = num_tiles * tile_n
    vmem_limit = int(min(budget, max(32 << 20, resident + tile_n * per_row + (8 << 20))))
    return tile_n, n_pad, vmem_limit


def entity_embeddings_forward(entity_ids, position_ids, ent_table, w_dense,
                              pos_table, tok0, gamma, beta, *, eps=1e-5,
                              out_dtype=jnp.bfloat16):
    """entity_ids: (N,) int32; position_ids: (N, P) int32 (-1 = padded mention slot).

    ent_table: (Vent, E), w_dense: (E, H) (pre-transposed Linear weight, or None if E == H),
    pos_table: (Vpos, H), tok0/gamma/beta: (1, H).  Returns (N, H) in out_dtype.
    """
    N, P = position_ids.shape
    V_pos, H = pos_table.shape

    # Fold the dense projection into the entity table once (plain XLA): removes the tiny-K
    # per-tile matmul and one resident VMEM operand.
    if w_dense is not None and ent_table.shape[1] != H:
        fused_table = ent_table.astype(jnp.float32) @ w_dense.astype(jnp.float32)
    else:
        fused_table = ent_table
    fused_table = fused_table.astype(jnp.bfloat16)       # native MXU path (f32 acc in kernel)
    pos_table_bf16 = pos_table.astype(jnp.bfloat16)
    V_ent = fused_table.shape[0]

    out_bytes = jnp.dtype(out_dtype).itemsize
    tile_n, n_pad, vmem_limit = _pick_tiling(N, P, V_ent, V_pos, H, out_bytes,
                                             _vmem_budget_bytes())
    if n_pad != N:
        entity_ids = jnp.pad(entity_ids, (0, n_pad - N))                  # pad ids -> row 0
        position_ids = jnp.pad(position_ids, ((0, n_pad - N), (0, 0)),
                               constant_values=-1)                        # fully masked rows
    ent_ids2d = entity_ids.reshape(n_pad, 1).astype(jnp.int32)
    position_ids = position_ids.astype(jnp.int32)

    kernel = functools.partial(entity_emb_kernel, eps=eps)

    out = pl.pallas_call(
        kernel,
        out_shape=jax.ShapeDtypeStruct((n_pad, H), out_dtype),
        grid_spec=pltpu.PrefetchScalarGridSpec(
            num_scalar_prefetch=0,
            grid=(n_pad // tile_n,),
            in_specs=[
                pl.BlockSpec((tile_n, 1), lambda i: (i, 0)),    # entity ids (per-tile stream)
                pl.BlockSpec((tile_n, P), lambda i: (i, 0)),    # position ids (per-tile stream)
                pl.BlockSpec((V_ent, H), lambda i: (0, 0)),     # fused entity table (resident, bf16)
                pl.BlockSpec((V_pos, H), lambda i: (0, 0)),     # position table (resident, bf16)
                pl.BlockSpec((1, H), lambda i: (0, 0)),         # token-type row 0 (f32)
                pl.BlockSpec((1, H), lambda i: (0, 0)),         # gamma
                pl.BlockSpec((1, H), lambda i: (0, 0)),         # beta
            ],
            out_specs=pl.BlockSpec((tile_n, H), lambda i: (i, 0)),
        ),
        compiler_params=pltpu.CompilerParams(
            dimension_semantics=("parallel",),
            vmem_limit_bytes=vmem_limit),
    )(ent_ids2d, position_ids, fused_table, pos_table_bf16,
      tok0.astype(jnp.float32), gamma.astype(jnp.float32), beta.astype(jnp.float32))

    return out[:N]


def reference_forward(position_ids, entity_ids, ent_table, w_torch,
                      pos_table, tok_table, gamma, beta, eps):
    """Pure-JAX f32 reference mirroring the PyTorch module (3-D position_ids path)."""
    ent = ent_table[entity_ids] @ w_torch.T                     # (B, L, H)
    pe = pos_table[jnp.clip(position_ids, 0)]                   # (B, L, P, H)
    m = (position_ids != -1).astype(jnp.float32)[..., None]
    pe = (pe * m).sum(-2) / jnp.clip(m.sum(-2), 1e-7)
    tte = tok_table[jnp.zeros(position_ids.shape[:2], jnp.int32)]
    e = ent + pe + tte
    mu = e.mean(-1, keepdims=True)
    var = ((e - mu) ** 2).mean(-1, keepdims=True)
    return (e - mu) / jnp.sqrt(var + eps) * gamma + beta


if __name__ == "__main__":
    # --- config (small, consistent with the module; H lane-dense) ---
    entity_vocab_size = 64
    entity_emb_size = 32       # E  (!= hidden_size -> dense projection path active)
    hidden_size = 128          # H  (multiple of 128 -> unmasked lane-dense stores)
    max_position_embeddings = 40
    type_vocab_size = 2
    layer_norm_eps = 1e-5
    B, L, P = 2, 7, 4          # N = 14 -> NOT a tile multiple (exercises padding + 2 grid steps)
    N = B * L

    key = jax.random.PRNGKey(0)
    k1, k2, k3, k4, k5, k6 = jax.random.split(key, 6)

    # --- deterministic parameters (synthetic init) ---
    ent_table = jax.random.normal(k1, (entity_vocab_size, entity_emb_size), jnp.float32) * 0.02
    w_torch = jax.random.normal(k2, (hidden_size, entity_emb_size), jnp.float32) * 0.02  # (out, in)
    pos_table = jax.random.normal(k3, (max_position_embeddings, hidden_size), jnp.float32) * 0.02
    tok_table = jax.random.normal(k4, (type_vocab_size, hidden_size), jnp.float32) * 0.02
    gamma = jnp.ones((hidden_size,), jnp.float32)   # LayerNorm default init
    beta = jnp.zeros((hidden_size,), jnp.float32)

    # --- deterministic inputs ---
    entity_ids = jax.random.randint(k5, (B, L), 0, entity_vocab_size, jnp.int32)
    position_ids = jax.random.randint(k6, (B, L, P), -1, max_position_embeddings, jnp.int32)

    out = entity_embeddings_forward(
        entity_ids.reshape(N), position_ids.reshape(N, P),
        ent_table, w_torch.T, pos_table, tok_table[0:1],
        gamma.reshape(1, -1), beta.reshape(1, -1),
        eps=layer_norm_eps, out_dtype=jnp.bfloat16)
    out = jax.block_until_ready(out)
    out = np.asarray(out.astype(jnp.float32)).reshape(B, L, hidden_size)

    ref = reference_forward(position_ids, entity_ids, ent_table, w_torch,
                            pos_table, tok_table, gamma, beta, layer_norm_eps)

    # bf16 tables + bf16 output relax the previous rtol=1e-5 check (expected precision
    # loss per the perf review, not a bug).
    np.testing.assert_allclose(out, np.asarray(ref), rtol=3e-2, atol=3e-2)
    print("KERNEL_OK")
</pallas_src>

<mosaic_0001>
module attributes {stable_mosaic.version = 11 : i64} {
  func.func @entity_emb_kernel(%arg0: i32, %arg1: memref<8x1xi32, #tpu.memory_space<vmem>>, %arg2: memref<8x4xi32, #tpu.memory_space<vmem>>, %arg3: memref<64x128xbf16, #tpu.memory_space<vmem>>, %arg4: memref<40x128xbf16, #tpu.memory_space<vmem>>, %arg5: memref<1x128xf32, #tpu.memory_space<vmem>>, %arg6: memref<1x128xf32, #tpu.memory_space<vmem>>, %arg7: memref<1x128xf32, #tpu.memory_space<vmem>>, %arg8: memref<8x128xbf16, #tpu.memory_space<vmem>>) attributes {dimension_semantics = [#tpu.dimension_semantics<parallel>], iteration_bounds = array<i64: 2>, scalar_prefetch = 0 : i64, scratch_operands = 0 : i64, tpu.core_type = #tpu.core_type<tc>, window_params = [{transform_indices = @transform_0, window_bounds = array<i64: 8, 1>}, {transform_indices = @transform_1, window_bounds = array<i64: 8, 4>}, {pipeline_mode = #tpu.pipeline_mode<synchronous>, transform_indices = @transform_2, window_bounds = array<i64: 64, 128>}, {pipeline_mode = #tpu.pipeline_mode<synchronous>, transform_indices = @transform_3, window_bounds = array<i64: 40, 128>}, {pipeline_mode = #tpu.pipeline_mode<synchronous>, transform_indices = @transform_4, window_bounds = array<i64: 1, 128>}, {pipeline_mode = #tpu.pipeline_mode<synchronous>, transform_indices = @transform_5, window_bounds = array<i64: 1, 128>}, {pipeline_mode = #tpu.pipeline_mode<synchronous>, transform_indices = @transform_6, window_bounds = array<i64: 1, 128>}, {transform_indices = @transform_7, window_bounds = array<i64: 8, 128>}]} {
    %0 = tpu.iota {dimensions = array<i32: 1>} : vector<8x64xi32>
    %c0 = arith.constant 0 : index
    %c0_0 = arith.constant 0 : index
    %1 = vector.load %arg1[%c0, %c0_0] : memref<8x1xi32, #tpu.memory_space<vmem>>, vector<8x1xi32>
    %2 = vector.broadcast %1 : vector<8x1xi32> to vector<8x64xi32>
    %3 = arith.cmpi eq, %2, %0 : vector<8x64xi32>
    %4 = arith.extui %3 : vector<8x64xi1> to vector<8x64xi32>
    %5 = arith.sitofp %4 : vector<8x64xi32> to vector<8x64xf32>
    %6 = arith.truncf %5 : vector<8x64xf32> to vector<8x64xbf16>
    %c0_1 = arith.constant 0 : index
    %c0_2 = arith.constant 0 : index
    %7 = vector.load %arg3[%c0_1, %c0_2] : memref<64x128xbf16, #tpu.memory_space<vmem>>, vector<64x128xbf16>
    %cst = arith.constant dense<0.000000e+00> : vector<8x128xf32>
    %8 = tpu.matmul %6, %7, %cst {dimension_numbers = #tpu.dot_dimension_numbers<[1], [0], [0], [1], [0, 0, 1, 1], [], []>} : vector<8x64xbf16>, vector<64x128xbf16>, vector<8x128xf32> -> vector<8x128xf32>
    %9 = tpu.iota {dimensions = array<i32: 1>} : vector<8x40xi32>
    %cst_3 = arith.constant 0.000000e+00 : f32
    %10 = vector.broadcast %cst_3 : f32 to vector<8x40xf32>
    %cst_4 = arith.constant 0.000000e+00 : f32
    %11 = vector.broadcast %cst_4 : f32 to vector<8x1xf32>
    %c0_5 = arith.constant 0 : index
    %c0_6 = arith.constant 0 : index
    %12 = vector.load %arg2[%c0_5, %c0_6] : memref<8x4xi32, #tpu.memory_space<vmem>>, vector<8x1xi32>
    %13 = vector.broadcast %12 : vector<8x1xi32> to vector<8x40xi32>
    %14 = arith.cmpi eq, %13, %9 : vector<8x40xi32>
    %15 = arith.extui %14 : vector<8x40xi1> to vector<8x40xi32>
    %16 = arith.sitofp %15 : vector<8x40xi32> to vector<8x40xf32>
    %17 = arith.addf %10, %16 : vector<8x40xf32>
    %c-1_i32 = arith.constant -1 : i32
    %18 = vector.broadcast %c-1_i32 : i32 to vector<8x1xi32>
    %19 = arith.cmpi ne, %12, %18 : vector<8x1xi32>
    %20 = arith.extui %19 : vector<8x1xi1> to vector<8x1xi32>
    %21 = arith.sitofp %20 : vector<8x1xi32> to vector<8x1xf32>
    %22 = arith.addf %11, %21 : vector<8x1xf32>
    %c0_7 = arith.constant 0 : index
    %c1 = arith.constant 1 : index
    %23 = vector.load %arg2[%c0_7, %c1] : memref<8x4xi32, #tpu.memory_space<vmem>>, vector<8x1xi32>
    %24 = vector.broadcast %23 : vector<8x1xi32> to vector<8x40xi32>
    %25 = arith.cmpi eq, %24, %9 : vector<8x40xi32>
    %26 = arith.extui %25 : vector<8x40xi1> to vector<8x40xi32>
    %27 = arith.sitofp %26 : vector<8x40xi32> to vector<8x40xf32>
    %28 = arith.addf %17, %27 : vector<8x40xf32>
    %c-1_i32_8 = arith.constant -1 : i32
    %29 = vector.broadcast %c-1_i32_8 : i32 to vector<8x1xi32>
    %30 = arith.cmpi ne, %23, %29 : vector<8x1xi32>
    %31 = arith.extui %30 : vector<8x1xi1> to vector<8x1xi32>
    %32 = arith.sitofp %31 : vector<8x1xi32> to vector<8x1xf32>
    %33 = arith.addf %22, %32 : vector<8x1xf32>
    %c0_9 = arith.constant 0 : index
    %c2 = arith.constant 2 : index
    %34 = vector.load %arg2[%c0_9, %c2] : memref<8x4xi32, #tpu.memory_space<vmem>>, vector<8x1xi32>
    %35 = vector.broadcast %34 : vector<8x1xi32> to vector<8x40xi32>
    %36 = arith.cmpi eq, %35, %9 : vector<8x40xi32>
    %37 = arith.extui %36 : vector<8x40xi1> to vector<8x40xi32>
    %38 = arith.sitofp %37 : vector<8x40xi32> to vector<8x40xf32>
    %39 = arith.addf %28, %38 : vector<8x40xf32>
    %c-1_i32_10 = arith.constant -1 : i32
    %40 = vector.broadcast %c-1_i32_10 : i32 to vector<8x1xi32>
    %41 = arith.cmpi ne, %34, %40 : vector<8x1xi32>
    %42 = arith.extui %41 : vector<8x1xi1> to vector<8x1xi32>
    %43 = arith.sitofp %42 : vector<8x1xi32> to vector<8x1xf32>
    %44 = arith.addf %33, %43 : vector<8x1xf32>
    %c0_11 = arith.constant 0 : index
    %c3 = arith.constant 3 : index
    %45 = vector.load %arg2[%c0_11, %c3] : memref<8x4xi32, #tpu.memory_space<vmem>>, vector<8x1xi32>
    %46 = vector.broadcast %45 : vector<8x1xi32> to vector<8x40xi32>
    %47 = arith.cmpi eq, %46, %9 : vector<8x40xi32>
    %48 = arith.extui %47 : vector<8x40xi1> to vector<8x40xi32>
    %49 = arith.sitofp %48 : vector<8x40xi32> to vector<8x40xf32>
    %50 = arith.addf %39, %49 : vector<8x40xf32>
    %c-1_i32_12 = arith.constant -1 : i32
    %51 = vector.broadcast %c-1_i32_12 : i32 to vector<8x1xi32>
    %52 = arith.cmpi ne, %45, %51 : vector<8x1xi32>
    %53 = arith.extui %52 : vector<8x1xi1> to vector<8x1xi32>
    %54 = arith.sitofp %53 : vector<8x1xi32> to vector<8x1xf32>
    %55 = arith.addf %44, %54 : vector<8x1xf32>
    %56 = arith.truncf %50 : vector<8x40xf32> to vector<8x40xbf16>
    %c0_13 = arith.constant 0 : index
    %c0_14 = arith.constant 0 : index
    %57 = vector.load %arg4[%c0_13, %c0_14] : memref<40x128xbf16, #tpu.memory_space<vmem>>, vector<40x128xbf16>
    %cst_15 = arith.constant dense<0.000000e+00> : vector<8x128xf32>
    %58 = tpu.matmul %56, %57, %cst_15 {dimension_numbers = #tpu.dot_dimension_numbers<[1], [0], [0], [1], [0, 0, 1, 1], [], []>} : vector<8x40xbf16>, vector<40x128xbf16>, vector<8x128xf32> -> vector<8x128xf32>
    %cst_16 = arith.constant 1.000000e-07 : f32
    %59 = vector.broadcast %cst_16 : f32 to vector<8x1xf32>
    %60 = arith.maximumf %55, %59 : vector<8x1xf32>
    %61 = tpu.reciprocal %60 : vector<8x1xf32> -> vector<8x1xf32>
    %62 = vector.broadcast %61 : vector<8x1xf32> to vector<8x128xf32>
    %63 = arith.mulf %58, %62 : vector<8x128xf32>
    %64 = arith.addf %8, %63 : vector<8x128xf32>
    %c0_17 = arith.constant 0 : index
    %c0_18 = arith.constant 0 : index
    %65 = vector.load %arg5[%c0_17, %c0_18] : memref<1x128xf32, #tpu.memory_space<vmem>>, vector<1x128xf32>
    %66 = vector.broadcast %65 : vector<1x128xf32> to vector<8x128xf32>
    %67 = arith.addf %64, %66 : vector<8x128xf32>
    %cst_19 = arith.constant dense<0.000000e+00> : vector<8xf32>
    %68 = vector.multi_reduction <add>, %67, %cst_19 [1] : vector<8x128xf32> to vector<8xf32>
    %69 = vector.shape_cast %68 : vector<8xf32> to vector<8x1xf32>
    %cst_20 = arith.constant 1.280000e+02 : f32
    %70 = vector.broadcast %cst_20 : f32 to vector<8x1xf32>
    %71 = arith.divf %69, %70 : vector<8x1xf32>
    %72 = vector.broadcast %71 : vector<8x1xf32> to vector<8x128xf32>
    %73 = arith.subf %67, %72 : vector<8x128xf32>
    %74 = arith.mulf %73, %73 : vector<8x128xf32>
    %cst_21 = arith.constant dense<0.000000e+00> : vector<8xf32>
    %75 = vector.multi_reduction <add>, %74, %cst_21 [1] : vector<8x128xf32> to vector<8xf32>
    %76 = vector.shape_cast %75 : vector<8xf32> to vector<8x1xf32>
    %cst_22 = arith.constant 1.280000e+02 : f32
    %77 = vector.broadcast %cst_22 : f32 to vector<8x1xf32>
    %78 = arith.divf %76, %77 : vector<8x1xf32>
    %cst_23 = arith.constant 9.99999974E-6 : f32
    %79 = vector.broadcast %cst_23 : f32 to vector<8x1xf32>
    %80 = arith.addf %78, %79 : vector<8x1xf32>
    %81 = math.rsqrt %80 : vector<8x1xf32>
    %82 = vector.broadcast %81 : vector<8x1xf32> to vector<8x128xf32>
    %83 = arith.mulf %73, %82 : vector<8x128xf32>
    %c0_24 = arith.constant 0 : index
    %c0_25 = arith.constant 0 : index
    %84 = vector.load %arg6[%c0_24, %c0_25] : memref<1x128xf32, #tpu.memory_space<vmem>>, vector<1x128xf32>
    %85 = vector.broadcast %84 : vector<1x128xf32> to vector<8x128xf32>
    %86 = arith.mulf %83, %85 : vector<8x128xf32>
    %c0_26 = arith.constant 0 : index
    %c0_27 = arith.constant 0 : index
    %87 = vector.load %arg7[%c0_26, %c0_27] : memref<1x128xf32, #tpu.memory_space<vmem>>, vector<1x128xf32>
    %88 = vector.broadcast %87 : vector<1x128xf32> to vector<8x128xf32>
    %89 = arith.addf %86, %88 : vector<8x128xf32>
    %90 = arith.truncf %89 : vector<8x128xf32> to vector<8x128xbf16>
    %c0_28 = arith.constant 0 : index
    %c0_29 = arith.constant 0 : index
    %91 = vector.load %arg8[%c0_28, %c0_29] : memref<8x128xbf16, #tpu.memory_space<vmem>>, vector<8x128xbf16>
    tpu.vector_store %arg8[%c0_28, %c0_29], %90 {strides = array<i32>} : memref<8x128xbf16, #tpu.memory_space<vmem>>, vector<8x128xbf16>,
    return
  }
  func.func @transform_0(%arg0: i32) -> (i32, i32) {
    %c0_i32 = arith.constant 0 : i32
    %c0_i32_0 = arith.constant 0 : i32
    return %arg0, %c0_i32 : i32, i32
  }
  func.func @transform_1(%arg0: i32) -> (i32, i32) {
    %c0_i32 = arith.constant 0 : i32
    %c0_i32_0 = arith.constant 0 : i32
    return %arg0, %c0_i32 : i32, i32
  }
  func.func @transform_2(%arg0: i32) -> (i32, i32) {
    %c0_i32 = arith.constant 0 : i32
    %c0_i32_0 = arith.constant 0 : i32
    %c0_i32_1 = arith.constant 0 : i32
    return %c0_i32, %c0_i32_0 : i32, i32
  }
  func.func @transform_3(%arg0: i32) -> (i32, i32) {
    %c0_i32 = arith.constant 0 : i32
    %c0_i32_0 = arith.constant 0 : i32
    %c0_i32_1 = arith.constant 0 : i32
    return %c0_i32, %c0_i32_0 : i32, i32
  }
  func.func @transform_4(%arg0: i32) -> (i32, i32) {
    %c0_i32 = arith.constant 0 : i32
    %c0_i32_0 = arith.constant 0 : i32
    %c0_i32_1 = arith.constant 0 : i32
    return %c0_i32, %c0_i32_0 : i32, i32
  }
  func.func @transform_5(%arg0: i32) -> (i32, i32) {
    %c0_i32 = arith.constant 0 : i32
    %c0_i32_0 = arith.constant 0 : i32
    %c0_i32_1 = arith.constant 0 : i32
    return %c0_i32, %c0_i32_0 : i32, i32
  }
  func.func @transform_6(%arg0: i32) -> (i32, i32) {
    %c0_i32 = arith.constant 0 : i32
    %c0_i32_0 = arith.constant 0 : i32
    %c0_i32_1 = arith.constant 0 : i32
    return %c0_i32, %c0_i32_0 : i32, i32
  }
  func.func @transform_7(%arg0: i32) -> (i32, i32) {
    %c0_i32 = arith.constant 0 : i32
    %c0_i32_0 = arith.constant 0 : i32
    return %arg0, %c0_i32 : i32, i32
  }
}

</mosaic_0001>

<llo_original>
// kernel: tpu_custom_call.1
$region0: #{tpu_custom_call.1}
  #allocation0 [shape = 'u32[]', space=smem, size = 0x4, offset = 0x4, fixed_abs, tag = 'smem constant byte address 0x4 - core index']
  #allocation1 [shape = 'u32[144,128]{1,0:T(1,128)}', space=vmem, size = 0x12000, scoped, tag = 'internal scratch']
  %s0 = inlined_call_operand.vmem [shape: s32[16,1], index: 0, kind: input, shape index: {}]
  %s1 = inlined_call_operand.vmem [shape: s32[16,4], index: 1, kind: input, shape index: {}]
  %s2 = inlined_call_operand.vmem [shape: bf16[64,128], index: 2, kind: input, shape index: {}]
  %s3 = inlined_call_operand.hbm [shape: bf16[40,128], index: 3, kind: input, shape index: {}]
  %s4 = inlined_call_operand.vmem [shape: f32[1,128], index: 4, kind: input, shape index: {}]
  %s5 = inlined_call_operand.vmem [shape: f32[1,128], index: 5, kind: input, shape index: {}]
  %s6 = inlined_call_operand.vmem [shape: f32[1,128], index: 6, kind: input, shape index: {}]
  %s7 = inlined_call_operand.hbm [shape: bf16[16,128], index: 7, kind: output, shape index: {}]
  %s8 = sld [smem:[#allocation0]]
  $region65: #{tpu_custom_call.1} parent=0
    _
  %s10 = ssub.s32 1, %s8
  %s11 = scalar_select 0, %s10, %s8
  $region1: #{tpu_custom_call.1} parent=0
    #allocation2 [shape = 'u8[10240]{0}', space=vmem, size = 0x2800, scoped, tag = 'input window, operand 3, single buffered']
    #allocation3 [shape = 's32[2]{0}', space=sflag, size = 0x8, scoped, tag = 'scoped memory for tpu_custom_call.1']
    #allocation4 [shape = 's32[2]{0}', space=sflag, size = 0x8, scoped, tag = 'scoped memory for tpu_custom_call.1']
    #allocation5 [shape = 'u8[4096]{0}', space=vmem, size = 0x1000, scoped, tag = 'output window, operand 0']
    %12 = vsyncpa [#allocation3], 0
    %13 = vsyncpa [#allocation4], 0
    %s14 = scalar_lea.sflag [#allocation4], 1
    %15 = vsyncpa %s14, 0
    loop: start=0, step=1, limit=4
    $region2: #{tpu_custom_call.1} parent=1 // loop_pre_header
      _
    $region3: #{tpu_custom_call.1} parent=1 // loop_header
      %s17 = sphi 0, %s21
      %p18 = scmp.ge.s32.totalorder %s17, 4
      %s27 = sphi 0, %s29
      %s30 = sphi 0, %s27
      %s31 = sphi 0, %s30
      %s47 = sphi 0, %s31
      %s53 = sphi 0, %s55
      %s56 = sphi 0, %s53
      %s57 = sphi 0, %s56
      %s73 = sphi 0, %s57
      %s77 = sphi 0, %s77
      %s79 = sphi 0, %s77
      %s80 = sphi 0, %s79
      %s94 = sphi 0, %s80
      %s98 = sphi 0, %s98
      %s100 = sphi 0, %s98
      %s101 = sphi 0, %s100
      %s115 = sphi 0, %s101
      %s119 = sphi 0, %s119
      %s121 = sphi 0, %s119
      %s122 = sphi 0, %s121
      %s136 = sphi 0, %s122
      %s140 = sphi 0, %s140
      %s142 = sphi 0, %s140
      %s143 = sphi 0, %s142
      %s157 = sphi 0, %s143
      %s161 = sphi 0, %s161
      %s163 = sphi 0, %s161
      %s164 = sphi 0, %s163
      %s178 = sphi 0, %s164
      %s184 = sphi 0, %s186
      %s187 = sphi 0, %s184
      %s188 = sphi 0, %s187
      %s204 = sphi 0, %s188
    $region4: #{tpu_custom_call.1} parent=1 // loop_header_branch
      %20 = sbr.rel (%p18) target = $region8
    $region5: #{tpu_custom_call.1} parent=1 // loop_body
      %s22 = ssub.s32 %s17, 1
      %s23 = ssub.s32 %s17, 2
      %s24 = sadd.s32 %s17, 1
      %s25 = ssub.s32 %s17, %s24
      %p26 = scmp.eq.s32.totalorder %s25, 0
      %s28 = sadd.s32 %s27, 1
      %s29 = scalar_select %p26, %s27, %s28
      %p32 = pneg %p26
      %p33 = scmp.eq.s32.totalorder %s17, 1
      %p34 = por %p32, %p33
      %p35 = scmp.ne.s32.totalorder %s27, %s30
      %p36 = scmp.eq.s32.totalorder %s17, 0
      %p37 = por %p35, %p36
      %p38 = scmp.ne.s32.totalorder %s27, %s30
      %p39 = scmp.eq.s32.totalorder %s22, 1
      %p40 = por %p38, %p39
      %p41 = scmp.ne.s32.totalorder %s30, %s31
      %p42 = scmp.eq.s32.totalorder %s22, 0
      %p43 = por %p41, %p42
      %p44 = scmp.ne.s32.totalorder %s30, %s31
      %p45 = scmp.eq.s32.totalorder %s23, 1
      %p46 = por %p44, %p45
      %p48 = scmp.ne.s32.totalorder %s31, %s47
      %p49 = scmp.eq.s32.totalorder %s23, 0
      %p50 = por %p48, %p49
      %s51 = ssub.s32 %s17, %s24
      %p52 = scmp.eq.s32.totalorder %s51, 0
      %s54 = sadd.s32 %s53, 1
      %s55 = scalar_select %p52, %s53, %s54
      %p58 = pneg %p52
      %p59 = scmp.eq.s32.totalorder %s17, 1
      %p60 = por %p58, %p59
      %p61 = scmp.ne.s32.totalorder %s53, %s56
      %p62 = scmp.eq.s32.totalorder %s17, 0
      %p63 = por %p61, %p62
      %p64 = scmp.ne.s32.totalorder %s53, %s56
      %p65 = scmp.eq.s32.totalorder %s22, 1
      %p66 = por %p64, %p65
      %p67 = scmp.ne.s32.totalorder %s56, %s57
      %p68 = scmp.eq.s32.totalorder %s22, 0
      %p69 = por %p67, %p68
      %p70 = scmp.ne.s32.totalorder %s56, %s57
      %p71 = scmp.eq.s32.totalorder %s23, 1
      %p72 = por %p70, %p71
      %p74 = scmp.ne.s32.totalorder %s57, %s73
      %p75 = scmp.eq.s32.totalorder %s23, 0
      %p76 = por %p74, %p75
      %s78 = sadd.s32 %s77, 1
      %p81 = scmp.eq.s32.totalorder %s17, 1
      %p82 = scmp.ne.s32.totalorder %s77, %s79
      %p83 = scmp.eq.s32.totalorder %s17, 0
      %p84 = por %p82, %p83
      %p85 = scmp.ne.s32.totalorder %s77, %s79
      %p86 = scmp.eq.s32.totalorder %s22, 1
      %p87 = por %p85, %p86
      %p88 = scmp.ne.s32.totalorder %s79, %s80
      %p89 = scmp.eq.s32.totalorder %s22, 0
      %p90 = por %p88, %p89
      %p91 = scmp.ne.s32.totalorder %s79, %s80
      %p92 = scmp.eq.s32.totalorder %s23, 1
      %p93 = por %p91, %p92
      %p95 = scmp.ne.s32.totalorder %s80, %s94
      %p96 = scmp.eq.s32.totalorder %s23, 0
      %p97 = por %p95, %p96
      %s99 = sadd.s32 %s98, 1
      %p102 = scmp.eq.s32.totalorder %s17, 1
      %p103 = scmp.ne.s32.totalorder %s98, %s100
      %p104 = scmp.eq.s32.totalorder %s17, 0
      %p105 = por %p103, %p104
      %p106 = scmp.ne.s32.totalorder %s98, %s100
      %p107 = scmp.eq.s32.totalorder %s22, 1
      %p108 = por %p106, %p107
      %p109 = scmp.ne.s32.totalorder %s100, %s101
      %p110 = scmp.eq.s32.totalorder %s22, 0
      %p111 = por %p109, %p110
      %p112 = scmp.ne.s32.totalorder %s100, %s101
      %p113 = scmp.eq.s32.totalorder %s23, 1
      %p114 = por %p112, %p113
      %p116 = scmp.ne.s32.totalorder %s101, %s115
      %p117 = scmp.eq.s32.totalorder %s23, 0
      %p118 = por %p116, %p117
      %s120 = sadd.s32 %s119, 1
      %p123 = scmp.eq.s32.totalorder %s17, 1
      %p124 = scmp.ne.s32.totalorder %s119, %s121
      %p125 = scmp.eq.s32.totalorder %s17, 0
      %p126 = por %p124, %p125
      %p127 = scmp.ne.s32.totalorder %s119, %s121
      %p128 = scmp.eq.s32.totalorder %s22, 1
      %p129 = por %p127, %p128
      %p130 = scmp.ne.s32.totalorder %s121, %s122
      %p131 = scmp.eq.s32.totalorder %s22, 0
      %p132 = por %p130, %p131
      %p133 = scmp.ne.s32.totalorder %s121, %s122
      %p134 = scmp.eq.s32.totalorder %s23, 1
      %p135 = por %p133, %p134
      %p137 = scmp.ne.s32.totalorder %s122, %s136
      %p138 = scmp.eq.s32.totalorder %s23, 0
      %p139 = por %p137, %p138
      %s141 = sadd.s32 %s140, 1
      %p144 = scmp.eq.s32.totalorder %s17, 1
      %p145 = scmp.ne.s32.totalorder %s140, %s142
      %p146 = scmp.eq.s32.totalorder %s17, 0
      %p147 = por %p145, %p146
      %p148 = scmp.ne.s32.totalorder %s140, %s142
      %p149 = scmp.eq.s32.totalorder %s22, 1
      %p150 = por %p148, %p149
      %p151 = scmp.ne.s32.totalorder %s142, %s143
      %p152 = scmp.eq.s32.totalorder %s22, 0
      %p153 = por %p151, %p152
      %p154 = scmp.ne.s32.totalorder %s142, %s143
      %p155 = scmp.eq.s32.totalorder %s23, 1
      %p156 = por %p154, %p155
      %p158 = scmp.ne.s32.totalorder %s143, %s157
      %p159 = scmp.eq.s32.totalorder %s23, 0
      %p160 = por %p158, %p159
      %s162 = sadd.s32 %s161, 1
      %p165 = scmp.eq.s32.totalorder %s17, 1
      %p166 = scmp.ne.s32.totalorder %s161, %s163
      %p167 = scmp.eq.s32.totalorder %s17, 0
      %p168 = por %p166, %p167
      %p169 = scmp.ne.s32.totalorder %s161, %s163
      %p170 = scmp.eq.s32.totalorder %s22, 1
      %p171 = por %p169, %p170
      %p172 = scmp.ne.s32.totalorder %s163, %s164
      %p173 = scmp.eq.s32.totalorder %s22, 0
      %p174 = por %p172, %p173
      %p175 = scmp.ne.s32.totalorder %s163, %s164
      %p176 = scmp.eq.s32.totalorder %s23, 1
      %p177 = por %p175, %p176
      %p179 = scmp.ne.s32.totalorder %s164, %s178
      %p180 = scmp.eq.s32.totalorder %s23, 0
      %p181 = por %p179, %p180
      %s182 = ssub.s32 %s17, %s24
      %p183 = scmp.eq.s32.totalorder %s182, 0
      %s185 = sadd.s32 %s184, 1
      %s186 = scalar_select %p183, %s184, %s185
      %p189 = pneg %p183
      %p190 = scmp.eq.s32.totalorder %s17, 1
      %p191 = por %p189, %p190
      %p192 = scmp.ne.s32.totalorder %s184, %s187
      %p193 = scmp.eq.s32.totalorder %s17, 0
      %p194 = por %p192, %p193
      %p195 = scmp.ne.s32.totalorder %s184, %s187
      %p196 = scmp.eq.s32.totalorder %s22, 1
      %p197 = por %p195, %p196
      %p198 = scmp.ne.s32.totalorder %s187, %s188
      %p199 = scmp.eq.s32.totalorder %s22, 0
      %p200 = por %p198, %p199
      %p201 = scmp.ne.s32.totalorder %s187, %s188
      %p202 = scmp.eq.s32.totalorder %s23, 1
      %p203 = por %p201, %p202
      %p205 = scmp.ne.s32.totalorder %s188, %s204
      %p206 = scmp.eq.s32.totalorder %s23, 0
      %p207 = por %p205, %p206
      %p208 = scmp.le.s32.totalorder 1, %s17
      %p209 = scmp.lt.s32.totalorder %s17, 3
      %p210 = pnand %p208, %p209
      %p211 = pneg %p210
      // Predicated region
      $region9: #{tpu_custom_call.1} parent=5 // pred_check
        _
      $region10: #{tpu_custom_call.1} parent=5 // pred_check_branch
        %213 = sbr.rel (%p210) target = $region12
      $region11: #{tpu_custom_call.1} parent=5 // pred_region
        %s214 = ssub.s32 %s17, 1
        // Predicated region
        $region13: #{tpu_custom_call.1} parent=11 // pred_check
          %p215 = pneg %p90
        $region14: #{tpu_custom_call.1} parent=11 // pred_check_branch
          %217 = sbr.rel (%p215) target = $region16
        $region15: #{tpu_custom_call.1} parent=11 // pred_region
          _
        $region16: #{tpu_custom_call.1} parent=11 // pred_fallthru
          _
        // Predicated region
        $region17: #{tpu_custom_call.1} parent=11 // pred_check
          %p218 = pneg %p111
        $region18: #{tpu_custom_call.1} parent=11 // pred_check_branch
          %220 = sbr.rel (%p218) target = $region20
        $region19: #{tpu_custom_call.1} parent=11 // pred_region
          %s222 = ssub.s32 320, 320
          %223 = vsyncadd [#allocation3], %s222
          %s224 = sshll.u32 [#allocation2], 4
          %s225 = int_to_ptr.vmem [resolvable:$true] %s224
          %230 = dma.hbm_to_vmem [thread:$0]  %s3, 320, %s225, [#allocation3], 64, 64, 4
        $region20: #{tpu_custom_call.1} parent=11 // pred_fallthru
          _
        // Predicated region
        $region21: #{tpu_custom_call.1} parent=11 // pred_check
          %p231 = pneg %p132
        $region22: #{tpu_custom_call.1} parent=11 // pred_check_branch
          %233 = sbr.rel (%p231) target = $region24
        $region23: #{tpu_custom_call.1} parent=11 // pred_region
          _
        $region24: #{tpu_custom_call.1} parent=11 // pred_fallthru
          _
        // Predicated region
        $region25: #{tpu_custom_call.1} parent=11 // pred_check
          %p234 = pneg %p153
        $region26: #{tpu_custom_call.1} parent=11 // pred_check_branch
          %236 = sbr.rel (%p234) target = $region28
        $region27: #{tpu_custom_call.1} parent=11 // pred_region
          _
        $region28: #{tpu_custom_call.1} parent=11 // pred_fallthru
          _
        // Predicated region
        $region29: #{tpu_custom_call.1} parent=11 // pred_check
          %p237 = pneg %p174
        $region30: #{tpu_custom_call.1} parent=11 // pred_check_branch
          %239 = sbr.rel (%p237) target = $region32
        $region31: #{tpu_custom_call.1} parent=11 // pred_region
          _
        $region32: #{tpu_custom_call.1} parent=11 // pred_fallthru
          _
      $region12: #{tpu_custom_call.1} parent=5 // pred_fallthru
        _
      %p240 = scmp.lt.s32.totalorder %s17, 2
      // Predicated region
      $region33: #{tpu_custom_call.1} parent=5 // pred_check
        %p241 = pneg %p240
      $region34: #{tpu_custom_call.1} parent=5 // pred_check_branch
        %243 = sbr.rel (%p241) target = $region36
      $region35: #{tpu_custom_call.1} parent=5 // pred_region
        // Predicated region
        $region37: #{tpu_custom_call.1} parent=35 // pred_check
          %p244 = pneg %p37
        $region38: #{tpu_custom_call.1} parent=35 // pred_check_branch
          %246 = sbr.rel (%p244) target = $region40
        $region39: #{tpu_custom_call.1} parent=35 // pred_region
          %p247 = scmp.lt.s32.totalorder %s17, 1
          %s248 = scalar_select %p247, %s17, 1
          %s249 = smul.addr %s248, 8
          %s250 = scalar_lea.vmem %s0, %s249
        $region40: #{tpu_custom_call.1} parent=35 // pred_fallthru
          _
        // Predicated region
        $region41: #{tpu_custom_call.1} parent=35 // pred_check
          %p251 = pneg %p63
        $region42: #{tpu_custom_call.1} parent=35 // pred_check_branch
          %253 = sbr.rel (%p251) target = $region44
        $region43: #{tpu_custom_call.1} parent=35 // pred_region
          %p254 = scmp.lt.s32.totalorder %s17, 1
          %s255 = scalar_select %p254, %s17, 1
          %s256 = smul.addr %s255, 8
          %s257 = scalar_lea.vmem %s1, %s256
        $region44: #{tpu_custom_call.1} parent=35 // pred_fallthru
          _
      $region36: #{tpu_custom_call.1} parent=5 // pred_fallthru
        _
      %p258 = scmp.le.s32.totalorder 1, %s17
      %p259 = scmp.lt.s32.totalorder %s17, 3
      %p260 = pnand %p258, %p259
      %p261 = pneg %p260
      // Predicated region
      $region45: #{tpu_custom_call.1} parent=5 // pred_check
        _
      $region46: #{tpu_custom_call.1} parent=5 // pred_check_branch
        %263 = sbr.rel (%p260) target = $region48
      $region47: #{tpu_custom_call.1} parent=5 // pred_region
        %s264 = ssub.s32 %s17, 1
        // Predicated region
        $region49: #{tpu_custom_call.1} parent=47 // pred_check
          %p265 = pneg %p111
        $region50: #{tpu_custom_call.1} parent=47 // pred_check_branch
          %267 = sbr.rel (%p265) target = $region52
        $region51: #{tpu_custom_call.1} parent=47 // pred_region
          %268 = dma.done [#allocation3], 320
        $region52: #{tpu_custom_call.1} parent=47 // pred_fallthru
          _
        %p269 = scmp.lt.s32.totalorder %s22, 1
        %s270 = scalar_select %p269, %s22, 1
        %s271 = smul.addr %s270, 8
        %s272 = scalar_lea.vmem %s0, %s271
        %p273 = pneg %p43
        %p274 = pneg %p40
        %p275 = scmp.lt.s32.totalorder %s22, 1
        %s276 = scalar_select %p275, %s22, 1
        %s277 = smul.addr %s276, 8
        %s278 = scalar_lea.vmem %s1, %s277
        %p279 = pneg %p69
        %p280 = pneg %p66
        %p281 = pneg %p90
        %p282 = pneg %p87
        %p283 = pneg %p111
        %p284 = pneg %p108
        %p285 = pneg %p132
        %p286 = pneg %p129
        %p287 = pneg %p153
        %p288 = pneg %p150
        %p289 = pneg %p174
        %p290 = pneg %p171
        %p291 = pneg %p200
        %p292 = pneg %p197
        %s293 = sand.u32 %s187, 1
        %s294 = scalar_lea.sflag [#allocation4], %s293
        %s295 = sand.u32 %s187, 1
        %s296 = smul.addr %s295, 4
        %s297 = scalar_lea.vmem [#allocation5], %s296
        %p298 = scmp.lt.s32.totalorder %s22, 1
        %s299 = scalar_select %p298, %s22, 1
        %s300 = smul.addr %s299, 8
        %s301 = scalar_lea.vmem %s0, %s300
        %p302 = scmp.lt.s32.totalorder %s22, 1
        %s303 = scalar_select %p302, %s22, 1
        %s304 = smul.addr %s303, 8
        %s305 = scalar_lea.vmem %s1, %s304
        %v307 = vlaneseq
        %v308 = vand.u32 %v307, 127
        %v309 = vld [vmem:[%s301] sm:$0xff]
        %310 = vset.pattern.permute.xlu0 0
        %311 = vperm.xlu0 %310, %v309
        %v312 = vpop.permute.xlu0 %311
        %vm313 = vcmp.eq.s32.totalorder %v312, %v308
        %v314 = vsel %vm313, 1, 0
        %v315 = vcvt.s32.f32 %v314
        %v316 = vpack.c.bf16 %v315, %v315
        %v317 = vld [vmem:[%s2] sm:$0xf]
        %v318 = vld [vmem:[%s2 + $0x4] sm:$0xf]
        %v319 = vld [vmem:[%s2 + $0x8] sm:$0xf]
        %v320 = vld [vmem:[%s2 + $0xc] sm:$0xf]
        %v321 = vld [vmem:[%s2 + $0x10] sm:$0xf]
        %v322 = vld [vmem:[%s2 + $0x14] sm:$0xf]
        %v323 = vld [vmem:[%s2 + $0x18] sm:$0xf]
        %v324 = vld [vmem:[%s2 + $0x1c] sm:$0xf]
        %v325 = vld [vmem:[%s305] sm:$0xff]
        %326 = vset.pattern.permute.xlu0 0
        %327 = vperm.xlu0 %326, %v325
        %v328 = vpop.permute.xlu0 %327
        %vm329 = vcmp.eq.s32.totalorder %v328, %v308
        %v330 = vsel %vm329, 1, 0
        %v331 = vcvt.s32.f32 %v330
        %v332 = vadd.f32 %v331, 0.0
        %vm333 = vcmp.ne.s32.totalorder %v325, 4294967295
        %v334 = vsel %vm333, 1, 0
        %v335 = vcvt.s32.f32 %v334
        %v336 = vadd.f32 %v335, 0.0
        %337 = vset.pattern.permute.xlu0 1
        %338 = vperm.xlu0 %337, %v325
        %v339 = vpop.permute.xlu0 %338
        %vm340 = vcmp.eq.s32.totalorder %v339, %v308
        %v341 = vsel %vm340, 1, 0
        %v342 = vcvt.s32.f32 %v341
        %v343 = vadd.f32 %v332, %v342
        %345 = vrot.lane.b32.xlu0 %v335, 127
        %v346 = vpop.permute.xlu0 %345
        %v348 = vadd.f32 %v336, %v346
        %349 = vset.pattern.permute.xlu0 2
        %350 = vperm.xlu0 %349, %v325
        %v351 = vpop.permute.xlu0 %350
        %vm352 = vcmp.eq.s32.totalorder %v351, %v308
        %v353 = vsel %vm352, 1, 0
        %v354 = vcvt.s32.f32 %v353
        %v355 = vadd.f32 %v343, %v354
        %356 = vrot.lane.b32.xlu0 %v335, 126
        %v357 = vpop.permute.xlu0 %356
        %v359 = vadd.f32 %v348, %v357
        %360 = vset.pattern.permute.xlu0 3
        %361 = vperm.xlu0 %360, %v325
        %v362 = vpop.permute.xlu0 %361
        %vm363 = vcmp.eq.s32.totalorder %v362, %v308
        %v364 = vsel %vm363, 1, 0
        %v365 = vcvt.s32.f32 %v364
        %v366 = vadd.f32 %v355, %v365
        %367 = vrot.lane.b32.xlu0 %v335, 125
        %v368 = vpop.permute.xlu0 %367
        %v370 = vadd.f32 %v359, %v368
        %v371 = vpack.c.bf16 %v366, %v366
        %v372 = vld [vmem:[#allocation2] sm:$0xf]
        %v373 = vld [vmem:[#allocation2 + $0x4] sm:$0xf]
        %v374 = vld [vmem:[#allocation2 + $0x8] sm:$0xf]
        %v375 = vld [vmem:[#allocation2 + $0xc] sm:$0xf]
        %v376 = vld [vmem:[#allocation2 + $0x10] sm:$0xf]
        %v382 = vunpack.c.l.b16 %v372
        %v383 = vunpack.c.l.b16 %v373
        %v384 = vunpack.c.l.b16 %v374
        %v385 = vunpack.c.l.b16 %v375
        %v386 = vunpack.c.l.b16 %v376
        %v387 = vpack.c.b16 %v383, %v382
        %v388 = vpack.c.b16 %v385, %v384
        %v389 = vpack.c.b16 %v386, %v386
        %vm392 = vcmask 326656
        %v394 = vsel %vm392, %v371, 0
        %vm396 = vcmask 1043456
        %v398 = vsel %vm396, %v389, 0
        %400 = vmatprep.subr.bf16.mxu0 0
        %401 = vmatpush1.bf16.msra.mxu0 %v387
        %402 = vmatprep.subr.bf16.mxu0 0
        %403 = vmatpush1.bf16.msra.mxu0 %v388
        %404 = vmatprep.subr.bf16.mxu0 0
        %405 = vmatpush1.bf16.msra.mxu0 %v398
        %406 = vmatprep.subr.bf16.mxu0 0
        %407 = vmatpush1.bf16.msra.mxu0 0
        %408 = vmatprep.subr.bf16.mxu0 0
        %409 = vmatpush1.bf16.msra.mxu0 0
        %410 = vmatprep.subr.bf16.mxu0 0
        %411 = vmatpush1.bf16.msra.mxu0 0
        %412 = vmatprep.subr.bf16.mxu0 0
        %413 = vmatpush1.bf16.msra.mxu0 0
        %414 = vmatprep.subr.bf16.mxu0 0
        %415 = vmatpush1.bf16.msra.mxu0 0
        %416 = vmatprep.subr.bf16.mxu0 0
        %417 = vmatpush1.bf16.msra.mxu0 0
        %418 = vmatprep.subr.bf16.mxu0 0
        %419 = vmatpush1.bf16.msra.mxu0 0
        %420 = vmatprep.subr.bf16.mxu0 0
        %421 = vmatpush1.bf16.msra.mxu0 0
        %422 = vmatprep.subr.bf16.mxu0 0
        %423 = vmatpush1.bf16.msra.mxu0 0
        %424 = vmatprep.subr.bf16.mxu0 0
        %425 = vmatpush1.bf16.msra.mxu0 0
        %426 = vmatprep.subr.bf16.mxu0 0
        %427 = vmatpush1.bf16.msra.mxu0 0
        %428 = vmatprep.subr.bf16.mxu0 0
        %429 = vmatpush1.bf16.msra.mxu0 0
        %430 = vmatprep.subr.bf16.mxu0 0
        %431 = vmatpush1.bf16.msra.mxu0 0
        %432 = vmatprep.mubr.bf16.mxu0 0
        %433 = vmatmul.mubr.bf16.gmra.mrb[0].mxu0 %v394
        %v434 = vpop.f32.mrb[0].mxu0
        %v435 = vadd.f32 0.0, %v434
        %v436 = vpop.f32.mrb[0].mxu0
        %v437 = vpop.f32.mrb[0].mxu0
        %v438 = vpop.f32.mrb[0].mxu0
        %439 = vdwg.mxu0
        %v440 = vmax.f32 %v370, 1e-07
        %v441 = vrcp.pop %v440
        %443 = vset.pattern.permute.xlu0 0
        %444 = vperm.xlu0 %443, %v441
        %v445 = vpop.permute.xlu0 %444
        %v447 = vmul.f32 %v435, %v445
        %v456 = vunpack.c.l.b16 %v317
        %v457 = vunpack.c.l.b16 %v318
        %v458 = vunpack.c.l.b16 %v319
        %v459 = vunpack.c.l.b16 %v320
        %v460 = vunpack.c.l.b16 %v321
        %v461 = vunpack.c.l.b16 %v322
        %v462 = vunpack.c.l.b16 %v323
        %v463 = vunpack.c.l.b16 %v324
        %v464 = vpack.c.b16 %v457, %v456
        %v465 = vpack.c.b16 %v459, %v458
        %v466 = vpack.c.b16 %v461, %v460
        %v467 = vpack.c.b16 %v463, %v462
        %vm472 = vcmask 523264
        %v474 = vsel %vm472, %v316, 0
        %476 = vmatprep.subr.bf16.mxu0 0
        %477 = vmatpush1.bf16.msra.mxu0 %v464
        %478 = vmatprep.subr.bf16.mxu0 0
        %479 = vmatpush1.bf16.msra.mxu0 %v465
        %480 = vmatprep.subr.bf16.mxu0 0
        %481 = vmatpush1.bf16.msra.mxu0 %v466
        %482 = vmatprep.subr.bf16.mxu0 0
        %483 = vmatpush1.bf16.msra.mxu0 %v467
        %484 = vmatprep.subr.bf16.mxu0 0
        %485 = vmatpush1.bf16.msra.mxu0 0
        %486 = vmatprep.subr.bf16.mxu0 0
        %487 = vmatpush1.bf16.msra.mxu0 0
        %488 = vmatprep.subr.bf16.mxu0 0
        %489 = vmatpush1.bf16.msra.mxu0 0
        %490 = vmatprep.subr.bf16.mxu0 0
        %491 = vmatpush1.bf16.msra.mxu0 0
        %492 = vmatprep.subr.bf16.mxu0 0
        %493 = vmatpush1.bf16.msra.mxu0 0
        %494 = vmatprep.subr.bf16.mxu0 0
        %495 = vmatpush1.bf16.msra.mxu0 0
        %496 = vmatprep.subr.bf16.mxu0 0
        %497 = vmatpush1.bf16.msra.mxu0 0
        %498 = vmatprep.subr.bf16.mxu0 0
        %499 = vmatpush1.bf16.msra.mxu0 0
        %500 = vmatprep.subr.bf16.mxu0 0
        %501 = vmatpush1.bf16.msra.mxu0 0
        %502 = vmatprep.subr.bf16.mxu0 0
        %503 = vmatpush1.bf16.msra.mxu0 0
        %504 = vmatprep.subr.bf16.mxu0 0
        %505 = vmatpush1.bf16.msra.mxu0 0
        %506 = vmatprep.subr.bf16.mxu0 0
        %507 = vmatpush1.bf16.msra.mxu0 0
        %508 = vmatprep.mubr.bf16.mxu0 0
        %509 = vmatmul.mubr.bf16.gmra.mrb[0].mxu0 %v474
        %v510 = vpop.f32.mrb[0].mxu0
        %v511 = vadd.f32 %v447, %v510
        %v512 = vpop.f32.mrb[0].mxu0
        %v513 = vpop.f32.mrb[0].mxu0
        %v514 = vpop.f32.mrb[0].mxu0
        %515 = vdwg.mxu0
        %v516 = vld [vmem:[%s4] sm:$0x1]
        %v518 = vlaneseq
        %v519 = vshrl.u32 %v518, 7
        %v520 = vsub.s32 0, %v519
        %v521 = vrot.slane %v516, %v520
        %v523 = vadd.f32 %v511, %v521
        %524 = vadd.xlane.f32.xlu0 %v523
        %v525 = vpop.xlane.xlu0 %524
        %v526 = vrcp.pop 128.0
        %v527 = vmul.f32 %v525, %v526
        %v528 = vsub.f32 %v523, %v527
        %v529 = vmul.f32 %v528, %v528
        %530 = vadd.xlane.f32.xlu0 %v529
        %v531 = vpop.xlane.xlu0 %530
        %v532 = vmul.f32 %v531, %v526
        %v533 = vadd.f32 %v532, 1e-05
        %v534 = vrsqrt.pop %v533
        %v535 = vmul.f32 %v528, %v534
        %v536 = vld [vmem:[%s5] sm:$0x1]
        %v538 = vlaneseq
        %v539 = vshrl.u32 %v538, 7
        %v540 = vsub.s32 0, %v539
        %v541 = vrot.slane %v536, %v540
        %v543 = vmul.f32 %v535, %v541
        %v544 = vld [vmem:[%s6] sm:$0x1]
        %v546 = vlaneseq
        %v547 = vshrl.u32 %v546, 7
        %v548 = vsub.s32 0, %v547
        %v549 = vrot.slane %v544, %v548
        %v551 = vadd.f32 %v543, %v549
        %v552 = vpack.c.bf16 %v551, %v551
        %553 = vst [vmem:[%s297] sm:$0xf] %v552
        %s554 = sand.u32 %s187, 1
        %s555 = scalar_lea.sflag [#allocation4], %s554
        %s556 = sand.u32 %s187, 1
        %s557 = smul.addr %s556, 4
        %s558 = scalar_lea.vmem [#allocation5], %s557
        // Predicated region
        $region53: #{tpu_custom_call.1} parent=47 // pred_check
          %p559 = pneg %p197
        $region54: #{tpu_custom_call.1} parent=47 // pred_check_branch
          %561 = sbr.rel (%p559) target = $region56
        $region55: #{tpu_custom_call.1} parent=47 // pred_region
          %s563 = ssub.s32 64, 64
          %564 = vsyncadd %s555, %s563
          %s565 = smul.addr %s22, 64
          %s566 = scalar_lea.hbm %s7, %s565
          %s568 = sshll.u32 %s558, 4
          %s569 = int_to_ptr.vmem [resolvable:$true] %s568
          %571 = dma.vmem_to_hbm [thread:$0]  %s569, 64, %s566, %s555
        $region56: #{tpu_custom_call.1} parent=47 // pred_fallthru
          _
      $region48: #{tpu_custom_call.1} parent=5 // pred_fallthru
        _
      %p572 = scmp.le.s32.totalorder 2, %s17
      // Predicated region
      $region57: #{tpu_custom_call.1} parent=5 // pred_check
        %p573 = pneg %p572
      $region58: #{tpu_custom_call.1} parent=5 // pred_check_branch
        %575 = sbr.rel (%p573) target = $region60
      $region59: #{tpu_custom_call.1} parent=5 // pred_region
        %s576 = ssub.s32 %s17, 2
        // Predicated region
        $region61: #{tpu_custom_call.1} parent=59 // pred_check
          %p577 = pneg %p203
        $region62: #{tpu_custom_call.1} parent=59 // pred_check_branch
          %579 = sbr.rel (%p577) target = $region64
        $region63: #{tpu_custom_call.1} parent=59 // pred_region
          %s580 = sand.u32 %s188, 1
          %s581 = scalar_lea.sflag [#allocation4], %s580
          %s582 = sand.u32 %s188, 1
          %s583 = smul.addr %s582, 4
          %s584 = scalar_lea.vmem [#allocation5], %s583
          %585 = dma.done %s581, 64
        $region64: #{tpu_custom_call.1} parent=59 // pred_fallthru
          _
      $region60: #{tpu_custom_call.1} parent=5 // pred_fallthru
        _
    $region6: #{tpu_custom_call.1} parent=1 // loop_footer
      %s21 = sadd.s32 1, %s17
    $region7: #{tpu_custom_call.1} parent=1 // loop_footer_branch
      %16 = sbr.rel target = $region3
    $region8: #{tpu_custom_call.1} parent=1 // loop_exit
      _
    %586 = vsyncpa [#allocation3], 1
    %s587 = scalar_lea.sflag [#allocation3], 1
    %588 = vsyncpa %s587, 1
    %589 = vsyncpa [#allocation4], 1
    %s590 = scalar_lea.sflag [#allocation4], 1
    %591 = vsyncpa %s590, 1

</llo_original>
